<compile_context>
chip_gen: v7x
topology: tpu7x:2x2x1
jax: 0.10.0
libtpu: 0.0.40
codegen_flags: <defaults>
</compile_context>

<pallas_src>
import jax
import jax.numpy as jnp
from jax.experimental import pallas as pl
from jax.experimental.pallas import tpu as pltpu

SUBLANES = 8       # sublane-aligned feature padding (2 real features -> 8)
LANES = 128        # lane granularity for the batch axis
MAX_TILE_B = 512   # batch-lane tile per grid step (well under VMEM on v5e/v6e/v7x)


def mlp_kernel(p_ref, xt_ref, o_ref):
    """p_ref: (12,) f32 in SMEM = [w1(2x2), b1(2), w2(2x2), b2(2)] flattened.
    xt_ref/o_ref: (8, TILE_B) f32 slabs, features on sublanes, batch on lanes."""
    x0 = xt_ref[0:1, :]                      # (1, TILE_B) lane-dense rows
    x1 = xt_ref[1:2, :]

    w1_00 = p_ref[0]; w1_01 = p_ref[1]
    w1_10 = p_ref[2]; w1_11 = p_ref[3]
    b1_0 = p_ref[4]; b1_1 = p_ref[5]
    w2_00 = p_ref[6]; w2_01 = p_ref[7]
    w2_10 = p_ref[8]; w2_11 = p_ref[9]
    b2_0 = p_ref[10]; b2_1 = p_ref[11]

    # Layer 1: VPU FMAs + EUP sigmoids (no MXU).
    h0 = jax.nn.sigmoid(w1_00 * x0 + w1_01 * x1 + b1_0)
    h1 = jax.nn.sigmoid(w1_10 * x0 + w1_11 * x1 + b1_1)
    # Layer 2.
    y0 = jax.nn.sigmoid(w2_00 * h0 + w2_01 * h1 + b2_0)
    y1 = jax.nn.sigmoid(w2_10 * h0 + w2_11 * h1 + b2_1)

    o_ref[...] = jnp.zeros_like(o_ref)       # deterministic padding sublanes
    o_ref[0:1, :] = y0
    o_ref[1:2, :] = y1


def pack_params(w1, b1, w2, b2):
    """Hoisted out of the per-call path: pack the 2x2 MLP into a flat SMEM table."""
    return jnp.concatenate(
        [w1.reshape(-1), b1.reshape(-1), w2.reshape(-1), b2.reshape(-1)]
    ).astype(jnp.float32)


@jax.jit
def net_forward(x, params):
    """x: (batch, 2) float32. params: (12,) float32 from pack_params. -> (batch, 2)."""
    batch, fin = x.shape
    assert fin <= SUBLANES

    # Batch lives on lanes: pick a lane tile (multiple of 128, capped at 512).
    tile_b = min(MAX_TILE_B, pl.cdiv(batch, LANES) * LANES)
    padded_b = pl.cdiv(batch, tile_b) * tile_b

    # Transposed, zero-padded activation slab: (features -> 8 sublanes, batch -> lanes).
    xt = jnp.zeros((SUBLANES, padded_b), jnp.float32).at[:fin, :batch].set(x.T)

    out = pl.pallas_call(
        mlp_kernel,
        out_shape=jax.ShapeDtypeStruct((SUBLANES, padded_b), jnp.float32),
        grid=(padded_b // tile_b,),
        in_specs=[
            pl.BlockSpec(memory_space=pltpu.MemorySpace.SMEM),     # 12 scalar params
            pl.BlockSpec((SUBLANES, tile_b), lambda i: (0, i)),    # x^T lane tile
        ],
        out_specs=pl.BlockSpec((SUBLANES, tile_b), lambda i: (0, i)),
        compiler_params=pltpu.CompilerParams(
            dimension_semantics=("parallel",)),                    # megacore on v7x
    )(params, xt)

    # First 2 sublanes are the real output features; back to (batch, 2).
    return out[:fin if fin == 2 else 2, :batch][:2, :batch].T


if __name__ == "__main__":
    # Deterministic parameters exactly as in the PyTorch module's __init__.
    w1 = jnp.array([[0.15, 0.20], [0.25, 0.30]], dtype=jnp.float32)  # (out=2, in=2)
    b1 = jnp.array([0.35, 0.35], dtype=jnp.float32)
    w2 = jnp.array([[0.40, 0.45], [0.50, 0.55]], dtype=jnp.float32)
    b2 = jnp.array([0.60, 0.60], dtype=jnp.float32)

    params = pack_params(w1, b1, w2, b2)   # packed once, reused every forward

    # Small deterministic input: batch=2, in_features=2 (matches the module).
    key = jax.random.PRNGKey(0)
    x = jax.random.uniform(key, (2, 2), dtype=jnp.float32)

    y = jax.block_until_ready(net_forward(x, params))

    # Pure-JAX reference check of the forward semantics.
    h_ref = jax.nn.sigmoid(x @ w1.T + b1)
    y_ref = jax.nn.sigmoid(h_ref @ w2.T + b2)
    assert y.shape == (2, 2)
    assert jnp.allclose(y, y_ref, atol=1e-5), (y, y_ref)

    # Also exercise a multi-tile batch to validate the grid / padding path.
    xb = jax.random.uniform(jax.random.PRNGKey(1), (1000, 2), dtype=jnp.float32)
    yb = jax.block_until_ready(net_forward(xb, params))
    yb_ref = jax.nn.sigmoid(jax.nn.sigmoid(xb @ w1.T + b1) @ w2.T + b2)
    assert yb.shape == (1000, 2)
    assert jnp.allclose(yb, yb_ref, atol=1e-5)

    print("KERNEL_OK")
</pallas_src>

<mosaic_0001>
module attributes {stable_mosaic.version = 11 : i64} {
  func.func @mlp_kernel(%arg0: i32, %arg1: memref<12xf32, #tpu.memory_space<smem>>, %arg2: memref<8x128xf32, #tpu.memory_space<vmem>>, %arg3: memref<8x128xf32, #tpu.memory_space<vmem>>) attributes {dimension_semantics = [#tpu.dimension_semantics<parallel>], iteration_bounds = array<i64: 1>, scalar_prefetch = 0 : i64, scratch_operands = 0 : i64, tpu.core_type = #tpu.core_type<tc>, window_params = [{transform_indices = @transform_0, window_bounds = array<i64: 12>}, {transform_indices = @transform_1, window_bounds = array<i64: 8, 128>}, {transform_indices = @transform_2, window_bounds = array<i64: 8, 128>}]} {
    %c0 = arith.constant 0 : index
    %c0_0 = arith.constant 0 : index
    %0 = vector.load %arg2[%c0, %c0_0] : memref<8x128xf32, #tpu.memory_space<vmem>>, vector<1x128xf32>
    %c1 = arith.constant 1 : index
    %c0_1 = arith.constant 0 : index
    %1 = vector.load %arg2[%c1, %c0_1] : memref<8x128xf32, #tpu.memory_space<vmem>>, vector<1x128xf32>
    %c0_2 = arith.constant 0 : index
    %2 = memref.load %arg1[%c0_2] : memref<12xf32, #tpu.memory_space<smem>>
    %c1_3 = arith.constant 1 : index
    %3 = memref.load %arg1[%c1_3] : memref<12xf32, #tpu.memory_space<smem>>
    %c2 = arith.constant 2 : index
    %4 = memref.load %arg1[%c2] : memref<12xf32, #tpu.memory_space<smem>>
    %c3 = arith.constant 3 : index
    %5 = memref.load %arg1[%c3] : memref<12xf32, #tpu.memory_space<smem>>
    %c4 = arith.constant 4 : index
    %6 = memref.load %arg1[%c4] : memref<12xf32, #tpu.memory_space<smem>>
    %c5 = arith.constant 5 : index
    %7 = memref.load %arg1[%c5] : memref<12xf32, #tpu.memory_space<smem>>
    %c6 = arith.constant 6 : index
    %8 = memref.load %arg1[%c6] : memref<12xf32, #tpu.memory_space<smem>>
    %c7 = arith.constant 7 : index
    %9 = memref.load %arg1[%c7] : memref<12xf32, #tpu.memory_space<smem>>
    %c8 = arith.constant 8 : index
    %10 = memref.load %arg1[%c8] : memref<12xf32, #tpu.memory_space<smem>>
    %c9 = arith.constant 9 : index
    %11 = memref.load %arg1[%c9] : memref<12xf32, #tpu.memory_space<smem>>
    %c10 = arith.constant 10 : index
    %12 = memref.load %arg1[%c10] : memref<12xf32, #tpu.memory_space<smem>>
    %c11 = arith.constant 11 : index
    %13 = memref.load %arg1[%c11] : memref<12xf32, #tpu.memory_space<smem>>
    %14 = vector.broadcast %2 : f32 to vector<1x128xf32>
    %15 = arith.mulf %14, %0 : vector<1x128xf32>
    %16 = vector.broadcast %3 : f32 to vector<1x128xf32>
    %17 = arith.mulf %16, %1 : vector<1x128xf32>
    %18 = arith.addf %15, %17 : vector<1x128xf32>
    %19 = vector.broadcast %6 : f32 to vector<1x128xf32>
    %20 = arith.addf %18, %19 : vector<1x128xf32>
    %21 = arith.negf %20 : vector<1x128xf32>
    %22 = math.exp %21 : vector<1x128xf32>
    %cst = arith.constant 1.000000e+00 : f32
    %23 = vector.broadcast %cst : f32 to vector<1x128xf32>
    %24 = arith.addf %23, %22 : vector<1x128xf32>
    %25 = arith.divf %23, %24 : vector<1x128xf32>
    %26 = vector.broadcast %4 : f32 to vector<1x128xf32>
    %27 = arith.mulf %26, %0 : vector<1x128xf32>
    %28 = vector.broadcast %5 : f32 to vector<1x128xf32>
    %29 = arith.mulf %28, %1 : vector<1x128xf32>
    %30 = arith.addf %27, %29 : vector<1x128xf32>
    %31 = vector.broadcast %7 : f32 to vector<1x128xf32>
    %32 = arith.addf %30, %31 : vector<1x128xf32>
    %33 = arith.negf %32 : vector<1x128xf32>
    %34 = math.exp %33 : vector<1x128xf32>
    %cst_4 = arith.constant 1.000000e+00 : f32
    %35 = vector.broadcast %cst_4 : f32 to vector<1x128xf32>
    %36 = arith.addf %35, %34 : vector<1x128xf32>
    %37 = arith.divf %35, %36 : vector<1x128xf32>
    %38 = vector.broadcast %8 : f32 to vector<1x128xf32>
    %39 = arith.mulf %38, %25 : vector<1x128xf32>
    %40 = vector.broadcast %9 : f32 to vector<1x128xf32>
    %41 = arith.mulf %40, %37 : vector<1x128xf32>
    %42 = arith.addf %39, %41 : vector<1x128xf32>
    %43 = vector.broadcast %12 : f32 to vector<1x128xf32>
    %44 = arith.addf %42, %43 : vector<1x128xf32>
    %45 = arith.negf %44 : vector<1x128xf32>
    %46 = math.exp %45 : vector<1x128xf32>
    %cst_5 = arith.constant 1.000000e+00 : f32
    %47 = vector.broadcast %cst_5 : f32 to vector<1x128xf32>
    %48 = arith.addf %47, %46 : vector<1x128xf32>
    %49 = arith.divf %47, %48 : vector<1x128xf32>
    %50 = vector.broadcast %10 : f32 to vector<1x128xf32>
    %51 = arith.mulf %50, %25 : vector<1x128xf32>
    %52 = vector.broadcast %11 : f32 to vector<1x128xf32>
    %53 = arith.mulf %52, %37 : vector<1x128xf32>
    %54 = arith.addf %51, %53 : vector<1x128xf32>
    %55 = vector.broadcast %13 : f32 to vector<1x128xf32>
    %56 = arith.addf %54, %55 : vector<1x128xf32>
    %57 = arith.negf %56 : vector<1x128xf32>
    %58 = math.exp %57 : vector<1x128xf32>
    %cst_6 = arith.constant 1.000000e+00 : f32
    %59 = vector.broadcast %cst_6 : f32 to vector<1x128xf32>
    %60 = arith.addf %59, %58 : vector<1x128xf32>
    %61 = arith.divf %59, %60 : vector<1x128xf32>
    %cst_7 = arith.constant 0.000000e+00 : f32
    %62 = vector.broadcast %cst_7 : f32 to vector<8x128xf32>
    %c0_8 = arith.constant 0 : index
    %c0_9 = arith.constant 0 : index
    %63 = vector.load %arg3[%c0_8, %c0_9] : memref<8x128xf32, #tpu.memory_space<vmem>>, vector<8x128xf32>
    tpu.vector_store %arg3[%c0_8, %c0_9], %62 {strides = array<i32>} : memref<8x128xf32, #tpu.memory_space<vmem>>, vector<8x128xf32>,
    %c0_10 = arith.constant 0 : index
    %c0_11 = arith.constant 0 : index
    %64 = vector.load %arg3[%c0_10, %c0_11] : memref<8x128xf32, #tpu.memory_space<vmem>>, vector<1x128xf32>
    tpu.vector_store %arg3[%c0_10, %c0_11], %49 {strides = array<i32>} : memref<8x128xf32, #tpu.memory_space<vmem>>, vector<1x128xf32>,
    %c1_12 = arith.constant 1 : index
    %c0_13 = arith.constant 0 : index
    %65 = vector.load %arg3[%c1_12, %c0_13] : memref<8x128xf32, #tpu.memory_space<vmem>>, vector<1x128xf32>
    tpu.vector_store %arg3[%c1_12, %c0_13], %61 {strides = array<i32>} : memref<8x128xf32, #tpu.memory_space<vmem>>, vector<1x128xf32>,
    return
  }
  func.func @transform_0(%arg0: i32) -> i32 {
    %c0_i32 = arith.constant 0 : i32
    %c0_i32_0 = arith.constant 0 : i32
    return %c0_i32 : i32
  }
  func.func @transform_1(%arg0: i32) -> (i32, i32) {
    %c0_i32 = arith.constant 0 : i32
    %c0_i32_0 = arith.constant 0 : i32
    return %c0_i32, %arg0 : i32, i32
  }
  func.func @transform_2(%arg0: i32) -> (i32, i32) {
    %c0_i32 = arith.constant 0 : i32
    %c0_i32_0 = arith.constant 0 : i32
    return %c0_i32, %arg0 : i32, i32
  }
}

</mosaic_0001>

<llo_original>
// kernel: net_forward.1
$region0: #{net_forward.1}
  #allocation0 [shape = 'u32[]', space=smem, size = 0x4, offset = 0x4, fixed_abs, tag = 'smem constant byte address 0x4 - core index']
  #allocation1 [shape = 'u32[144,128]{1,0:T(1,128)}', space=vmem, size = 0x12000, scoped, tag = 'internal scratch']
  %s0 = inlined_call_operand.vmem [shape: f32[12], index: 0, kind: input, shape index: {}]
  %s1 = inlined_call_operand.vmem [shape: f32[8,128], index: 1, kind: input, shape index: {}]
  %s2 = inlined_call_operand.vmem [shape: f32[8,128], index: 2, kind: output, shape index: {}]
  %s3 = sld [smem:[#allocation0]]
  $region22: #{net_forward.1} parent=0
    _
  %s5 = ssub.s32 1, %s3
  %s6 = scalar_select 0, %s5, %s3
  $region1: #{net_forward.1} parent=0
    #allocation2 [shape = 'u8[512]{0}', space=smem, size = 0x200, scoped, tag = 'input window, operand 0, single buffered']
    #allocation3 [shape = 's32[1]{0}', space=sflag, size = 0x4, scoped, tag = 'scoped memory for net_forward.1']
    %7 = vsyncpa [#allocation3], 0
    // Predicated region
    $region2: #{net_forward.1} parent=1 // pred_check
      _
    $region3: #{net_forward.1} parent=1 // pred_check_branch
      %9 = sbr.rel (0) target = $region5
    $region4: #{net_forward.1} parent=1 // pred_region
      %s11 = ssub.s32 16, 16
      %12 = vsyncadd [#allocation3], %s11
      %s14 = sshll.u32 %s0, 4
      %s15 = int_to_ptr.vmem [resolvable:$true] %s14
      %17 = dma.vmem_to_smem %s15, 16, [#allocation2], [#allocation3]
    $region5: #{net_forward.1} parent=1 // pred_fallthru
      _
    // Predicated region
    $region6: #{net_forward.1} parent=1 // pred_check
      _
    $region7: #{net_forward.1} parent=1 // pred_check_branch
      %19 = sbr.rel (0) target = $region9
    $region8: #{net_forward.1} parent=1 // pred_region
      _
    $region9: #{net_forward.1} parent=1 // pred_fallthru
      _
    // Predicated region
    $region10: #{net_forward.1} parent=1 // pred_check
      _
    $region11: #{net_forward.1} parent=1 // pred_check_branch
      %21 = sbr.rel (0) target = $region13
    $region12: #{net_forward.1} parent=1 // pred_region
      %22 = dma.done [#allocation3], 16
    $region13: #{net_forward.1} parent=1 // pred_fallthru
      _
    %23 = sfence
    %v24 = vld [vmem:[%s1] sm:$0x1]
    %v25 = vld [vmem:[%s1 + $0x1] sm:$0x1]
    %s26 = sld [smem:[#allocation2]]
    %s27 = sld [smem:[#allocation2 + $0x1]]
    %s28 = sld [smem:[#allocation2 + $0x2]]
    %s29 = sld [smem:[#allocation2 + $0x3]]
    %s30 = sld [smem:[#allocation2 + $0x4]]
    %s31 = sld [smem:[#allocation2 + $0x5]]
    %s32 = sld [smem:[#allocation2 + $0x6]]
    %s33 = sld [smem:[#allocation2 + $0x7]]
    %s34 = sld [smem:[#allocation2 + $0x8]]
    %s35 = sld [smem:[#allocation2 + $0x9]]
    %s36 = sld [smem:[#allocation2 + $0xa]]
    %s37 = sld [smem:[#allocation2 + $0xb]]
    %v38 = vstv %s26
    %v39 = vmul.f32 %v38, %v24
    %v40 = vstv %s27
    %v41 = vmul.f32 %v40, %v25
    %v42 = vadd.f32 %v39, %v41
    %v43 = vstv %s30
    %v44 = vadd.f32 %v42, %v43
    %v45 = vxor.u32 %v44, 2147483648
    %v46 = vmul.f32 %v45, 1.442695
    %v47 = vpow.pop %v46
    %v48 = vadd.f32 %v47, 1.0
    %v49 = vrcp.pop %v48
    %v50 = vmul.f32 1.0, %v49
    %v51 = vstv %s28
    %v52 = vmul.f32 %v51, %v24
    %v53 = vstv %s29
    %v54 = vmul.f32 %v53, %v25
    %v55 = vadd.f32 %v52, %v54
    %v56 = vstv %s31
    %v57 = vadd.f32 %v55, %v56
    %v58 = vxor.u32 %v57, 2147483648
    %v59 = vmul.f32 %v58, 1.442695
    %v60 = vpow.pop %v59
    %v61 = vadd.f32 %v60, 1.0
    %v62 = vrcp.pop %v61
    %v63 = vmul.f32 1.0, %v62
    %v64 = vstv %s32
    %v65 = vmul.f32 %v64, %v50
    %v66 = vstv %s33
    %v67 = vmul.f32 %v66, %v63
    %v68 = vadd.f32 %v65, %v67
    %v69 = vstv %s36
    %v70 = vadd.f32 %v68, %v69
    %v71 = vxor.u32 %v70, 2147483648
    %v72 = vmul.f32 %v71, 1.442695
    %v73 = vpow.pop %v72
    %v74 = vadd.f32 %v73, 1.0
    %v75 = vrcp.pop %v74
    %v76 = vmul.f32 1.0, %v75
    %v77 = vstv %s34
    %v78 = vmul.f32 %v77, %v50
    %v79 = vstv %s35
    %v80 = vmul.f32 %v79, %v63
    %v81 = vadd.f32 %v78, %v80
    %v82 = vstv %s37
    %v83 = vadd.f32 %v81, %v82
    %v84 = vxor.u32 %v83, 2147483648
    %v85 = vmul.f32 %v84, 1.442695
    %v86 = vpow.pop %v85
    %v87 = vadd.f32 %v86, 1.0
    %v88 = vrcp.pop %v87
    %v89 = vmul.f32 1.0, %v88
    %90 = vst [vmem:[%s2] sm:$0xff] 0.0
    %91 = vst [vmem:[%s2] sm:$0x1] %v76
    %92 = vst [vmem:[%s2 + $0x1] sm:$0x1] %v89
    // Predicated region
    $region14: #{net_forward.1} parent=1 // pred_check
      _
    $region15: #{net_forward.1} parent=1 // pred_check_branch
      %94 = sbr.rel (0) target = $region17
    $region16: #{net_forward.1} parent=1 // pred_region
      _
    $region17: #{net_forward.1} parent=1 // pred_fallthru
      _
    // Predicated region
    $region18: #{net_forward.1} parent=1 // pred_check
      _
    $region19: #{net_forward.1} parent=1 // pred_check_branch
      %96 = sbr.rel (0) target = $region21
    $region20: #{net_forward.1} parent=1 // pred_region
      _
    $region21: #{net_forward.1} parent=1 // pred_fallthru
      _
    %97 = vsyncpa [#allocation3], 1

</llo_original>
